<compile_context>
chip_gen: v6e
topology: v6e:2x2x1
jax: 0.10.0
libtpu: 0.0.40
codegen_flags: <defaults>
</compile_context>

<pallas_src>
import functools

import jax
import jax.numpy as jnp
from jax.experimental import pallas as pl
from jax.experimental.pallas import tpu as pltpu


NEG_INF = -1e30  # finite "minus infinity" for the online-softmax running max


# --------------------------------------------------------------------------- #
# Kernels
# --------------------------------------------------------------------------- #
def proj_kernel(x_ref, wp_ref, bp_ref, out_ref):
    """Fused g/theta/phi 1x1 convolutions: one (3*Cip, C) x (C, tn) matmul."""
    x = x_ref[0].astype(jnp.bfloat16)                          # (C, tn)
    r = jnp.dot(wp_ref[...], x, preferred_element_type=jnp.float32)
    out_ref[0] = (r + bp_ref[...]).astype(jnp.bfloat16)        # (3*Cip, tn)


def attn_kernel(g_ref, th_ref, ph_ref, ww_ref, bw_ref,
                y_ref, psum_ref, pssq_ref,
                m_sc, l_sc, acc_sc, *, n_valid, tq, tkv, padded):
    """Flash-style online softmax over kv tiles, MXU-native layouts.

      scores s        : (tkv, tq) = einsum('ck,cq->kq', phi, theta)
      running max/sum : (1, tq)
      accumulator acc : (Cip, tq) = einsum('ck,kq->cq', g, p)

    Finalize stores the normalized attention output y in bf16 and emits the
    per-(b, q-tile) BatchNorm partial statistics of W(y), so no separate
    bn_stats pass (and no extra HBM read of the intermediate) is needed.
    """
    ki = pl.program_id(2)

    @pl.when(ki == 0)
    def _():
        m_sc[...] = jnp.full(m_sc.shape, NEG_INF, m_sc.dtype)
        l_sc[...] = jnp.zeros_like(l_sc)
        acc_sc[...] = jnp.zeros_like(acc_sc)

    th = th_ref[0]                                             # (Cip, tq)  bf16
    ph = ph_ref[0]                                             # (Cip, tkv) bf16
    g = g_ref[0]                                               # (Cip, tkv) bf16

    # scores s[k, q] = sum_c phi[c, k] * theta[c, q]  (f32 MXU accumulation)
    s = jnp.einsum('ck,cq->kq', ph, th, preferred_element_type=jnp.float32)

    if padded:  # mask kv columns that are zero-padding of N
        kv_idx = ki * tkv + jax.lax.broadcasted_iota(jnp.int32, s.shape, 0)
        s = jnp.where(kv_idx < n_valid, s, NEG_INF)

    m_prev = m_sc[...]                                         # (1, tq)
    m_new = jnp.maximum(m_prev, jnp.max(s, axis=0, keepdims=True))
    alpha = jnp.exp(m_prev - m_new)                            # rescale factor
    p = jnp.exp(s - m_new)                                     # (tkv, tq) f32

    l_sc[...] = alpha * l_sc[...] + jnp.sum(p, axis=0, keepdims=True)
    # acc[c, q] += sum_k g[c, k] * p[k, q]   (native (M,K) x (K,N), no transposes)
    acc_sc[...] = alpha * acc_sc[...] + jnp.einsum(
        'ck,kq->cq', g, p.astype(jnp.bfloat16),
        preferred_element_type=jnp.float32)
    m_sc[...] = m_new

    @pl.when(ki == pl.num_programs(2) - 1)
    def _():
        inv_l = pl.reciprocal(l_sc[...], approx=False)         # (1, tq)
        y = (acc_sc[...] * inv_l).astype(jnp.bfloat16)         # (Cip, tq)
        y_ref[0] = y                                           # bf16 intermediate

        # Fused BatchNorm partial statistics of W(y) (tiny matmul, stats only).
        w_y = jnp.dot(ww_ref[...], y, preferred_element_type=jnp.float32)
        w_y = w_y + bw_ref[...]                                # (C, tq) f32
        if padded:  # drop padded q columns from the statistics
            q_idx = (pl.program_id(1) * tq
                     + jax.lax.broadcasted_iota(jnp.int32, (1, tq), 1))
            qmask = (q_idx < n_valid).astype(jnp.float32)
            w_y_m = w_y * qmask
            psum_ref[0, 0] = jnp.sum(w_y_m, axis=1, keepdims=True)
            pssq_ref[0, 0] = jnp.sum(w_y_m * w_y, axis=1, keepdims=True)
        else:
            psum_ref[0, 0] = jnp.sum(w_y, axis=1, keepdims=True)
            pssq_ref[0, 0] = jnp.sum(w_y * w_y, axis=1, keepdims=True)


def bn_apply_kernel(y_ref, x_ref, ww_ref, scale_ref, shift_ref, out_ref):
    """z = W(y) * scale + shift + x  with scale = rsqrt(var+eps),
    shift = (bW - mean) * scale  (BatchNorm2d, gamma=1, beta=0, batch stats).

    The 1x1 W conv is recomputed here from the bf16 y intermediate: this pass
    is HBM-bound so the matmul is free, and storing y (Cip = C/2, bf16) instead
    of w_y (C, f32) cuts the intermediate HBM round-trip by 4x while keeping
    the statistics and the apply numerically consistent (same bf16 operands).
    """
    w_dot = jnp.dot(ww_ref[...], y_ref[0], preferred_element_type=jnp.float32)
    out_ref[0] = w_dot * scale_ref[...] + shift_ref[...] + x_ref[0]


# --------------------------------------------------------------------------- #
# Wrapper
# --------------------------------------------------------------------------- #
def _compiler_params(semantics, est_vmem_bytes):
    # Raise the scoped-VMEM limit only when the estimated footprint approaches
    # v5e's 16 MiB default; otherwise keep the compiler default.
    vmem_limit = None
    if est_vmem_bytes > 12 * 1024 * 1024:
        vmem_limit = min(int(est_vmem_bytes) + (8 << 20), 100 << 20)
    return pltpu.CompilerParams(dimension_semantics=semantics,
                                vmem_limit_bytes=vmem_limit)


def nonlocal_forward(x, params):
    B, C, H, W = x.shape
    N = H * W
    Ci = C // 2
    # bf16 packs two rows per sublane -> pad the inter-plane dim to 16s.
    Cip = max(16, ((Ci + 15) // 16) * 16)

    # Pad the spatial axis to a multiple of 128; padded kv columns are masked
    # to -inf before the softmax, padded q columns are dropped from the BN
    # statistics and sliced off at the end.
    Np = ((N + 127) // 128) * 128
    padded = Np != N

    def pick_tile(n, prefs):
        for t in prefs:
            if n % t == 0:
                return t
        return n

    tn = pick_tile(Np, (512, 256, 128))          # mem-bound passes: big tiles
    tq = tkv = 256 if Np % 256 == 0 else 128     # fills v6e/v7x 256x256 MXU

    # NOTE: if the surrounding model runs in bf16, x can be fed as bf16 here to
    # halve the input DMA bytes; kept f32 to match the f32 module semantics.
    x2 = x.reshape(B, C, N).astype(jnp.float32)
    if padded:
        x2 = jnp.pad(x2, ((0, 0), (0, 0), (0, Np - N)))

    # ---- pack + zero-pad parameters (host side, one-time) -------------------
    def pad_rows(w, rows):
        return jnp.zeros((rows,) + w.shape[1:], w.dtype).at[:w.shape[0]].set(w)

    # stacked projection weight: rows [0:Cip)=g, [Cip:2Cip)=theta, [2Cip:3Cip)=phi
    wp = jnp.concatenate([pad_rows(params['wg'], Cip),
                          pad_rows(params['wth'], Cip),
                          pad_rows(params['wph'], Cip)], axis=0)
    bp = jnp.concatenate([pad_rows(params['bg'], Cip),
                          pad_rows(params['bth'], Cip),
                          pad_rows(params['bph'], Cip)], axis=0)
    ww = jnp.zeros((C, Cip), jnp.float32).at[:, :Ci].set(params['wW'])

    wp_bf16 = wp.astype(jnp.bfloat16)                          # (3*Cip, C)
    bp_f32 = bp.astype(jnp.float32)                            # (3*Cip, 1)
    ww_bf16 = ww.astype(jnp.bfloat16)                          # (C, Cip)
    bw_f32 = params['bW'].astype(jnp.float32)                  # (C, 1)

    # ---- 1) fused g/theta/phi projections -----------------------------------
    proj_vmem = (2 * C * tn * 4 + 2 * 3 * Cip * C * 2 + 2 * 3 * Cip * 4
                 + 2 * 3 * Cip * tn * 2)
    proj = pl.pallas_call(
        proj_kernel,
        out_shape=jax.ShapeDtypeStruct((B, 3 * Cip, Np), jnp.bfloat16),
        grid=(B, Np // tn),
        in_specs=[pl.BlockSpec((1, C, tn), lambda b, t: (b, 0, t)),
                  pl.BlockSpec((3 * Cip, C), lambda b, t: (0, 0)),
                  pl.BlockSpec((3 * Cip, 1), lambda b, t: (0, 0))],
        out_specs=pl.BlockSpec((1, 3 * Cip, tn), lambda b, t: (b, 0, t)),
        compiler_params=_compiler_params(("parallel", "parallel"), proj_vmem),
    )(x2, wp_bf16, bp_f32)

    # ---- 2) flash-style attention + fused BN partial statistics -------------
    nq = Np // tq
    nk = Np // tkv
    attn_vmem = (2 * 2 * Cip * tkv * 2 + 2 * Cip * tq * 2 + 2 * C * Cip * 2
                 + 2 * C * 4 + 2 * Cip * tq * 2 + 4 * C * 4
                 + 2 * tq * 4 * 2 + Cip * tq * 4)
    y_bf16, psum, pssq = pl.pallas_call(
        functools.partial(attn_kernel, n_valid=N, tq=tq, tkv=tkv, padded=padded),
        out_shape=(jax.ShapeDtypeStruct((B, Cip, Np), jnp.bfloat16),
                   jax.ShapeDtypeStruct((B, nq, C, 1), jnp.float32),
                   jax.ShapeDtypeStruct((B, nq, C, 1), jnp.float32)),
        grid=(B, nq, nk),
        in_specs=[pl.BlockSpec((1, Cip, tkv), lambda b, q, k: (b, 0, k)),  # g
                  pl.BlockSpec((1, Cip, tq), lambda b, q, k: (b, 1, q)),   # theta
                  pl.BlockSpec((1, Cip, tkv), lambda b, q, k: (b, 2, k)),  # phi
                  pl.BlockSpec((C, Cip), lambda b, q, k: (0, 0)),          # W wgt
                  pl.BlockSpec((C, 1), lambda b, q, k: (0, 0))],           # W bias
        out_specs=(pl.BlockSpec((1, Cip, tq), lambda b, q, k: (b, 0, q)),
                   pl.BlockSpec((1, 1, C, 1), lambda b, q, k: (b, q, 0, 0)),
                   pl.BlockSpec((1, 1, C, 1), lambda b, q, k: (b, q, 0, 0))),
        scratch_shapes=[pltpu.VMEM((1, tq), jnp.float32),      # running max
                        pltpu.VMEM((1, tq), jnp.float32),      # running sum
                        pltpu.VMEM((Cip, tq), jnp.float32)],   # y accumulator
        compiler_params=_compiler_params(
            ("parallel", "parallel", "arbitrary"), attn_vmem),
    )(proj, proj, proj, ww_bf16, bw_f32)

    # ---- 3) finish the global BatchNorm statistics (tiny, outside Pallas) ---
    count = float(B * N)
    mean = jnp.sum(psum, axis=(0, 1)) / count                  # (C, 1)
    var = jnp.sum(pssq, axis=(0, 1)) / count - mean * mean     # biased variance
    scale = jax.lax.rsqrt(var + 1e-5)                          # (C, 1)
    shift = (bw_f32 - mean) * scale                            # W bias folded in

    # ---- 4) W conv + BN apply + residual -------------------------------------
    bn_vmem = (2 * Cip * tn * 2 + 2 * C * tn * 4 + 2 * C * Cip * 2
               + 4 * C * 4 + 2 * C * tn * 4)
    z = pl.pallas_call(
        bn_apply_kernel,
        out_shape=jax.ShapeDtypeStruct((B, C, Np), jnp.float32),
        grid=(B, Np // tn),
        in_specs=[pl.BlockSpec((1, Cip, tn), lambda b, t: (b, 0, t)),
                  pl.BlockSpec((1, C, tn), lambda b, t: (b, 0, t)),
                  pl.BlockSpec((C, Cip), lambda b, t: (0, 0)),
                  pl.BlockSpec((C, 1), lambda b, t: (0, 0)),
                  pl.BlockSpec((C, 1), lambda b, t: (0, 0))],
        out_specs=pl.BlockSpec((1, C, tn), lambda b, t: (b, 0, t)),
        compiler_params=_compiler_params(("parallel", "parallel"), bn_vmem),
    )(y_bf16, x2, ww_bf16, scale, shift)

    if padded:
        z = z[:, :, :N]
    return z.reshape(B, C, H, W)


# --------------------------------------------------------------------------- #
# Params / reference / test
# --------------------------------------------------------------------------- #
def init_params(key, inplanes):
    """Deterministic synthetic params; shapes match the PyTorch module
    (1x1 conv weights squeezed to 2D, biases as (out, 1) columns)."""
    ci = inplanes // 2
    ks = jax.random.split(key, 8)

    def u(k, shape, fan_in):
        bound = 1.0 / (fan_in ** 0.5)
        return jax.random.uniform(k, shape, jnp.float32, -bound, bound)

    return dict(
        wg=u(ks[0], (ci, inplanes), inplanes), bg=u(ks[1], (ci, 1), inplanes),
        wth=u(ks[2], (ci, inplanes), inplanes), bth=u(ks[3], (ci, 1), inplanes),
        wph=u(ks[4], (ci, inplanes), inplanes), bph=u(ks[5], (ci, 1), inplanes),
        wW=u(ks[6], (inplanes, ci), ci), bW=u(ks[7], (inplanes, 1), ci),
    )


def reference(x, params):
    """Pure-JAX f32 reference mirroring the PyTorch forward semantics."""
    B, C, H, W = x.shape
    N = H * W
    xr = x.reshape(B, C, N).astype(jnp.float32)
    g = jnp.einsum('oc,bcn->bon', params['wg'], xr) + params['bg'][None]
    th = jnp.einsum('oc,bcn->bon', params['wth'], xr) + params['bth'][None]
    ph = jnp.einsum('oc,bcn->bon', params['wph'], xr) + params['bph'][None]
    f = jnp.einsum('bcm,bcn->bmn', th, ph)
    p = jax.nn.softmax(f, axis=-1)
    y = jnp.einsum('bmn,bcn->bcm', p, g)
    w_y = jnp.einsum('oc,bcn->bon', params['wW'], y) + params['bW'][None]
    mean = jnp.mean(w_y, axis=(0, 2), keepdims=True)
    var = jnp.mean((w_y - mean) ** 2, axis=(0, 2), keepdims=True)
    z = (w_y - mean) * jax.lax.rsqrt(var + 1e-5) + xr
    return z.reshape(B, C, H, W)


if __name__ == "__main__":
    key = jax.random.PRNGKey(0)
    kx, kp = jax.random.split(key)

    B, C, H, W = 2, 8, 16, 16          # inplanes=8 -> inter_planes=4, N=256
    x = jax.random.normal(kx, (B, C, H, W), dtype=jnp.float32)
    params = init_params(kp, C)

    out = nonlocal_forward(x, params)
    jax.block_until_ready(out)

    ref = reference(x, params)
    max_err = float(jnp.max(jnp.abs(out - ref)))
    mean_err = float(jnp.mean(jnp.abs(out - ref)))
    assert out.shape == x.shape and out.dtype == jnp.float32
    # bf16 MXU operands (f32 accumulation) + BN normalization amplification:
    # loose max tolerance, tighter mean tolerance vs the pure-f32 reference.
    assert max_err < 1e-1, f"max abs err {max_err}"
    assert mean_err < 2e-2, f"mean abs err {mean_err}"

    print("KERNEL_OK")
</pallas_src>

<mosaic_0001>
module attributes {stable_mosaic.version = 11 : i64} {
  func.func @proj_kernel(%arg0: i32, %arg1: i32, %arg2: memref<1x8x256xf32, #tpu.memory_space<vmem>>, %arg3: memref<48x8xbf16, #tpu.memory_space<vmem>>, %arg4: memref<48x1xf32, #tpu.memory_space<vmem>>, %arg5: memref<1x48x256xbf16, #tpu.memory_space<vmem>>) attributes {dimension_semantics = [#tpu.dimension_semantics<parallel>, #tpu.dimension_semantics<parallel>], iteration_bounds = array<i64: 2, 1>, scalar_prefetch = 0 : i64, scratch_operands = 0 : i64, tpu.core_type = #tpu.core_type<tc>, window_params = [{transform_indices = @transform_0, window_bounds = array<i64: 1, 8, 256>}, {pipeline_mode = #tpu.pipeline_mode<synchronous>, transform_indices = @transform_1, window_bounds = array<i64: 48, 8>}, {pipeline_mode = #tpu.pipeline_mode<synchronous>, transform_indices = @transform_2, window_bounds = array<i64: 48, 1>}, {transform_indices = @transform_3, window_bounds = array<i64: 1, 48, 256>}]} {
    %c0 = arith.constant 0 : index
    %c0_0 = arith.constant 0 : index
    %c0_1 = arith.constant 0 : index
    %0 = vector.load %arg2[%c0, %c0_0, %c0_1] : memref<1x8x256xf32, #tpu.memory_space<vmem>>, vector<1x8x256xf32>
    %1 = vector.shape_cast %0 : vector<1x8x256xf32> to vector<8x256xf32>
    %2 = arith.truncf %1 : vector<8x256xf32> to vector<8x256xbf16>
    %c0_2 = arith.constant 0 : index
    %c0_3 = arith.constant 0 : index
    %3 = vector.load %arg3[%c0_2, %c0_3] : memref<48x8xbf16, #tpu.memory_space<vmem>>, vector<48x8xbf16>
    %cst = arith.constant dense<0.000000e+00> : vector<48x256xf32>
    %4 = tpu.matmul %3, %2, %cst {dimension_numbers = #tpu.dot_dimension_numbers<[1], [0], [0], [1], [0, 0, 1, 1], [], []>} : vector<48x8xbf16>, vector<8x256xbf16>, vector<48x256xf32> -> vector<48x256xf32>
    %c0_4 = arith.constant 0 : index
    %c0_5 = arith.constant 0 : index
    %5 = vector.load %arg4[%c0_4, %c0_5] : memref<48x1xf32, #tpu.memory_space<vmem>>, vector<48x1xf32>
    %6 = vector.broadcast %5 : vector<48x1xf32> to vector<48x256xf32>
    %7 = arith.addf %4, %6 : vector<48x256xf32>
    %8 = arith.truncf %7 : vector<48x256xf32> to vector<48x256xbf16>
    %c0_6 = arith.constant 0 : index
    %c0_7 = arith.constant 0 : index
    %c0_8 = arith.constant 0 : index
    %9 = vector.load %arg5[%c0_6, %c0_7, %c0_8] : memref<1x48x256xbf16, #tpu.memory_space<vmem>>, vector<1x48x256xbf16>
    %10 = vector.shape_cast %9 : vector<1x48x256xbf16> to vector<48x256xbf16>
    %11 = vector.shape_cast %8 : vector<48x256xbf16> to vector<1x48x256xbf16>
    tpu.vector_store %arg5[%c0_6, %c0_7, %c0_8], %11 {strides = array<i32>} : memref<1x48x256xbf16, #tpu.memory_space<vmem>>, vector<1x48x256xbf16>,
    return
  }
  func.func @transform_0(%arg0: i32, %arg1: i32) -> (i32, i32, i32) {
    %c0_i32 = arith.constant 0 : i32
    %c0_i32_0 = arith.constant 0 : i32
    return %arg0, %c0_i32, %arg1 : i32, i32, i32
  }
  func.func @transform_1(%arg0: i32, %arg1: i32) -> (i32, i32) {
    %c0_i32 = arith.constant 0 : i32
    %c0_i32_0 = arith.constant 0 : i32
    %c0_i32_1 = arith.constant 0 : i32
    return %c0_i32, %c0_i32_0 : i32, i32
  }
  func.func @transform_2(%arg0: i32, %arg1: i32) -> (i32, i32) {
    %c0_i32 = arith.constant 0 : i32
    %c0_i32_0 = arith.constant 0 : i32
    %c0_i32_1 = arith.constant 0 : i32
    return %c0_i32, %c0_i32_0 : i32, i32
  }
  func.func @transform_3(%arg0: i32, %arg1: i32) -> (i32, i32, i32) {
    %c0_i32 = arith.constant 0 : i32
    %c0_i32_0 = arith.constant 0 : i32
    return %arg0, %c0_i32, %arg1 : i32, i32, i32
  }
}

</mosaic_0001>

<llo_original>
// kernel: tpu_custom_call.1
$region0: #{tpu_custom_call.1}
  #allocation0 [shape = 'u32[]', space=smem, size = 0x4, offset = 0x4, fixed_abs, tag = 'smem constant byte address 0x4 - core index']
  #allocation1 [shape = 'u32[144,128]{1,0:T(1,128)}', space=vmem, size = 0x12000, scoped, tag = 'internal scratch']
  %s0 = inlined_call_operand.vmem [shape: f32[2,8,256], index: 0, kind: input, shape index: {}]
  %s1 = inlined_call_operand.vmem [shape: bf16[48,8], index: 1, kind: input, shape index: {}]
  %s2 = inlined_call_operand.vmem [shape: f32[48,1], index: 2, kind: input, shape index: {}]
  %s3 = inlined_call_operand.hbm [shape: bf16[2,48,256], index: 3, kind: output, shape index: {}]
  %s4 = sld [smem:[#allocation0]]
  $region45: #{tpu_custom_call.1} parent=0
    _
  %s6 = ssub.s32 1, %s4
  %s7 = scalar_select 0, %s6, %s4
  $region1: #{tpu_custom_call.1} parent=0
    #allocation2 [shape = 'u8[49152]{0}', space=vmem, size = 0xc000, scoped, tag = 'output window, operand 0']
    #allocation3 [shape = 's32[2]{0}', space=sflag, size = 0x8, scoped, tag = 'scoped memory for tpu_custom_call.1']
    %8 = vsyncpa [#allocation3], 0
    %s9 = scalar_lea.sflag [#allocation3], 1
    %10 = vsyncpa %s9, 0
    loop: start=0, step=1, limit=4
    $region2: #{tpu_custom_call.1} parent=1 // loop_pre_header
      _
    $region3: #{tpu_custom_call.1} parent=1 // loop_header
      %s12 = sphi 0, %s16
      %p13 = scmp.ge.s32.totalorder %s12, 4
      %s19 = sphi 0, %s31
      %s20 = sphi 0, %s27
      %s21 = sphi 0, %s19
      %s22 = sphi 0, %s20
      %s23 = sphi 0, %s21
      %s24 = sphi 0, %s22
      %s36 = sphi 0, %s38
      %s39 = sphi 0, %s36
      %s40 = sphi 0, %s39
      %s56 = sphi 0, %s40
      %s60 = sphi 0, %s60
      %s62 = sphi 0, %s60
      %s63 = sphi 0, %s62
      %s77 = sphi 0, %s63
      %s81 = sphi 0, %s81
      %s83 = sphi 0, %s81
      %s84 = sphi 0, %s83
      %s98 = sphi 0, %s84
      %s106 = sphi 0, %s108
      %s109 = sphi 0, %s106
      %s110 = sphi 0, %s109
      %s126 = sphi 0, %s110
    $region4: #{tpu_custom_call.1} parent=1 // loop_header_branch
      %15 = sbr.rel (%p13) target = $region8
    $region5: #{tpu_custom_call.1} parent=1 // loop_body
      %s17 = ssub.s32 %s12, 1
      %s18 = ssub.s32 %s12, 2
      %s25 = sadd.s32 1, %s20
      %p26 = scmp.ge.s32.totalorder %s25, 1
      %s27 = scalar_select %p26, 0, %s25
      %s28 = sadd.s32 1, %s19
      %s29 = scalar_select %p26, %s28, %s19
      %p30 = scmp.ge.s32.totalorder %s29, 2
      %s31 = scalar_select %p30, 0, %s29
      %s32 = ssub.s32 %s19, %s31
      %s33 = ssub.s32 %s20, %s27
      %s34 = sor.u32 %s32, %s33
      %p35 = scmp.eq.s32.totalorder %s34, 0
      %s37 = sadd.s32 %s36, 1
      %s38 = scalar_select %p35, %s36, %s37
      %p41 = pneg %p35
      %p42 = scmp.eq.s32.totalorder %s12, 1
      %p43 = por %p41, %p42
      %p44 = scmp.ne.s32.totalorder %s36, %s39
      %p45 = scmp.eq.s32.totalorder %s12, 0
      %p46 = por %p44, %p45
      %p47 = scmp.ne.s32.totalorder %s36, %s39
      %p48 = scmp.eq.s32.totalorder %s17, 1
      %p49 = por %p47, %p48
      %p50 = scmp.ne.s32.totalorder %s39, %s40
      %p51 = scmp.eq.s32.totalorder %s17, 0
      %p52 = por %p50, %p51
      %p53 = scmp.ne.s32.totalorder %s39, %s40
      %p54 = scmp.eq.s32.totalorder %s18, 1
      %p55 = por %p53, %p54
      %p57 = scmp.ne.s32.totalorder %s40, %s56
      %p58 = scmp.eq.s32.totalorder %s18, 0
      %p59 = por %p57, %p58
      %s61 = sadd.s32 %s60, 1
      %p64 = scmp.eq.s32.totalorder %s12, 1
      %p65 = scmp.ne.s32.totalorder %s60, %s62
      %p66 = scmp.eq.s32.totalorder %s12, 0
      %p67 = por %p65, %p66
      %p68 = scmp.ne.s32.totalorder %s60, %s62
      %p69 = scmp.eq.s32.totalorder %s17, 1
      %p70 = por %p68, %p69
      %p71 = scmp.ne.s32.totalorder %s62, %s63
      %p72 = scmp.eq.s32.totalorder %s17, 0
      %p73 = por %p71, %p72
      %p74 = scmp.ne.s32.totalorder %s62, %s63
      %p75 = scmp.eq.s32.totalorder %s18, 1
      %p76 = por %p74, %p75
      %p78 = scmp.ne.s32.totalorder %s63, %s77
      %p79 = scmp.eq.s32.totalorder %s18, 0
      %p80 = por %p78, %p79
      %s82 = sadd.s32 %s81, 1
      %p85 = scmp.eq.s32.totalorder %s12, 1
      %p86 = scmp.ne.s32.totalorder %s81, %s83
      %p87 = scmp.eq.s32.totalorder %s12, 0
      %p88 = por %p86, %p87
      %p89 = scmp.ne.s32.totalorder %s81, %s83
      %p90 = scmp.eq.s32.totalorder %s17, 1
      %p91 = por %p89, %p90
      %p92 = scmp.ne.s32.totalorder %s83, %s84
      %p93 = scmp.eq.s32.totalorder %s17, 0
      %p94 = por %p92, %p93
      %p95 = scmp.ne.s32.totalorder %s83, %s84
      %p96 = scmp.eq.s32.totalorder %s18, 1
      %p97 = por %p95, %p96
      %p99 = scmp.ne.s32.totalorder %s84, %s98
      %p100 = scmp.eq.s32.totalorder %s18, 0
      %p101 = por %p99, %p100
      %s102 = ssub.s32 %s19, %s31
      %s103 = ssub.s32 %s20, %s27
      %s104 = sor.u32 %s102, %s103
      %p105 = scmp.eq.s32.totalorder %s104, 0
      %s107 = sadd.s32 %s106, 1
      %s108 = scalar_select %p105, %s106, %s107
      %p111 = pneg %p105
      %p112 = scmp.eq.s32.totalorder %s12, 1
      %p113 = por %p111, %p112
      %p114 = scmp.ne.s32.totalorder %s106, %s109
      %p115 = scmp.eq.s32.totalorder %s12, 0
      %p116 = por %p114, %p115
      %p117 = scmp.ne.s32.totalorder %s106, %s109
      %p118 = scmp.eq.s32.totalorder %s17, 1
      %p119 = por %p117, %p118
      %p120 = scmp.ne.s32.totalorder %s109, %s110
      %p121 = scmp.eq.s32.totalorder %s17, 0
      %p122 = por %p120, %p121
      %p123 = scmp.ne.s32.totalorder %s109, %s110
      %p124 = scmp.eq.s32.totalorder %s18, 1
      %p125 = por %p123, %p124
      %p127 = scmp.ne.s32.totalorder %s110, %s126
      %p128 = scmp.eq.s32.totalorder %s18, 0
      %p129 = por %p127, %p128
      %p130 = scmp.le.s32.totalorder 1, %s12
      %p131 = scmp.lt.s32.totalorder %s12, 3
      %p132 = pnand %p130, %p131
      %p133 = pneg %p132
      // Predicated region
      $region9: #{tpu_custom_call.1} parent=5 // pred_check
        _
      $region10: #{tpu_custom_call.1} parent=5 // pred_check_branch
        %135 = sbr.rel (%p132) target = $region12
      $region11: #{tpu_custom_call.1} parent=5 // pred_region
        %s136 = ssub.s32 %s12, 1
        // Predicated region
        $region13: #{tpu_custom_call.1} parent=11 // pred_check
          %p137 = pneg %p73
        $region14: #{tpu_custom_call.1} parent=11 // pred_check_branch
          %139 = sbr.rel (%p137) target = $region16
        $region15: #{tpu_custom_call.1} parent=11 // pred_region
          _
        $region16: #{tpu_custom_call.1} parent=11 // pred_fallthru
          _
        // Predicated region
        $region17: #{tpu_custom_call.1} parent=11 // pred_check
          %p140 = pneg %p94
        $region18: #{tpu_custom_call.1} parent=11 // pred_check_branch
          %142 = sbr.rel (%p140) target = $region20
        $region19: #{tpu_custom_call.1} parent=11 // pred_region
          _
        $region20: #{tpu_custom_call.1} parent=11 // pred_fallthru
          _
      $region12: #{tpu_custom_call.1} parent=5 // pred_fallthru
        _
      %p143 = scmp.lt.s32.totalorder %s12, 2
      // Predicated region
      $region21: #{tpu_custom_call.1} parent=5 // pred_check
        %p144 = pneg %p143
      $region22: #{tpu_custom_call.1} parent=5 // pred_check_branch
        %146 = sbr.rel (%p144) target = $region24
      $region23: #{tpu_custom_call.1} parent=5 // pred_region
        // Predicated region
        $region25: #{tpu_custom_call.1} parent=23 // pred_check
          %p147 = pneg %p46
        $region26: #{tpu_custom_call.1} parent=23 // pred_check_branch
          %149 = sbr.rel (%p147) target = $region28
        $region27: #{tpu_custom_call.1} parent=23 // pred_region
          %s150 = smul.u32 2, %s20
          %p151 = scmp.lt.s32.totalorder %s19, 1
          %s152 = scalar_select %p151, %s19, 1
          %p153 = scmp.lt.s32.totalorder %s150, 1
          %s154 = scalar_select %p153, %s150, 1
          %s155 = smul.addr %s152, 2
          %s156 = sadd.s32 %s154, %s155
          %s157 = smul.addr %s156, 8
          %s158 = scalar_lea.vmem %s0, %s157
          %s159 = smul.u32 2, %s20
        $region28: #{tpu_custom_call.1} parent=23 // pred_fallthru
          _
      $region24: #{tpu_custom_call.1} parent=5 // pred_fallthru
        _
      %p160 = scmp.le.s32.totalorder 1, %s12
      %p161 = scmp.lt.s32.totalorder %s12, 3
      %p162 = pnand %p160, %p161
      %p163 = pneg %p162
      // Predicated region
      $region29: #{tpu_custom_call.1} parent=5 // pred_check
        _
      $region30: #{tpu_custom_call.1} parent=5 // pred_check_branch
        %165 = sbr.rel (%p162) target = $region32
      $region31: #{tpu_custom_call.1} parent=5 // pred_region
        %s166 = ssub.s32 %s12, 1
        %s167 = smul.u32 2, %s22
        %p168 = scmp.lt.s32.totalorder %s21, 1
        %s169 = scalar_select %p168, %s21, 1
        %p170 = scmp.lt.s32.totalorder %s167, 1
        %s171 = scalar_select %p170, %s167, 1
        %s172 = smul.addr %s169, 2
        %s173 = sadd.s32 %s171, %s172
        %s174 = smul.addr %s173, 8
        %s175 = scalar_lea.vmem %s0, %s174
        %p176 = pneg %p52
        %p177 = pneg %p49
        %p178 = pneg %p73
        %p179 = pneg %p70
        %p180 = pneg %p94
        %p181 = pneg %p91
        %p182 = pneg %p122
        %p183 = pneg %p119
        %s184 = sand.u32 %s109, 1
        %s185 = scalar_lea.sflag [#allocation3], %s184
        %s186 = sand.u32 %s109, 1
        %s187 = smul.addr %s186, 48
        %s188 = scalar_lea.vmem [#allocation2], %s187
        %s189 = smul.u32 2, %s22
        %p190 = scmp.lt.s32.totalorder %s21, 1
        %s191 = scalar_select %p190, %s21, 1
        %p192 = scmp.lt.s32.totalorder %s189, 1
        %s193 = scalar_select %p192, %s189, 1
        %s194 = smul.addr %s191, 2
        %s195 = sadd.s32 %s193, %s194
        %s196 = smul.addr %s195, 8
        %s197 = scalar_lea.vmem %s0, %s196
        %s198 = smul.u32 2, %s22
        %s199 = smul.u32 2, %s22
        %v201 = vld [vmem:[%s197] sm:$0xff]
        %v202 = vld [vmem:[%s197 + $0x8] sm:$0xff]
        %v203 = vpack.c.bf16 %v201, %v201
        %v204 = vpack.c.bf16 %v202, %v202
        %v205 = vld [vmem:[%s1] sm:$0xf]
        %v206 = vld [vmem:[%s1 + $0x4] sm:$0xf]
        %v207 = vld [vmem:[%s1 + $0x8] sm:$0xf]
        %v208 = vld [vmem:[%s1 + $0xc] sm:$0xf]
        %v209 = vld [vmem:[%s1 + $0x10] sm:$0xf]
        %v210 = vld [vmem:[%s1 + $0x14] sm:$0xf]
        %v211 = vld [vmem:[%s2] sm:$0xff]
        %v212 = vld [vmem:[%s2 + $0x8] sm:$0xff]
        %v213 = vld [vmem:[%s2 + $0x10] sm:$0xff]
        %v214 = vld [vmem:[%s2 + $0x18] sm:$0xff]
        %v215 = vld [vmem:[%s2 + $0x20] sm:$0xff]
        %v216 = vld [vmem:[%s2 + $0x28] sm:$0xff]
        %218 = vset.pattern.permute.xlu0 0
        %219 = vperm.xlu0 %218, %v211
        %v220 = vpop.permute.xlu0 %219
        %223 = vset.pattern.permute.xlu0 0
        %224 = vperm.xlu0 %223, %v212
        %v225 = vpop.permute.xlu0 %224
        %228 = vset.pattern.permute.xlu0 0
        %229 = vperm.xlu0 %228, %v213
        %v230 = vpop.permute.xlu0 %229
        %233 = vset.pattern.permute.xlu0 0
        %234 = vperm.xlu0 %233, %v214
        %v235 = vpop.permute.xlu0 %234
        %238 = vset.pattern.permute.xlu0 0
        %239 = vperm.xlu0 %238, %v215
        %v240 = vpop.permute.xlu0 %239
        %243 = vset.pattern.permute.xlu0 0
        %244 = vperm.xlu0 %243, %v216
        %v245 = vpop.permute.xlu0 %244
        %v253 = vunpack.c.l.b16 %v205
        %v254 = vunpack.c.l.b16 %v206
        %v255 = vunpack.c.l.b16 %v207
        %v256 = vunpack.c.l.b16 %v208
        %v257 = vunpack.c.l.b16 %v209
        %v258 = vunpack.c.l.b16 %v210
        %v259 = vpack.c.b16 %v254, %v253
        %v260 = vpack.c.b16 %v256, %v255
        %v261 = vpack.c.b16 %v258, %v257
        %vm262 = vcmask 64512
        %v264 = vsel %vm262, %v259, 0
        %v267 = vsel %vm262, %v260, 0
        %v270 = vsel %vm262, %v261, 0
        %vm272 = vcmask 1043456
        %v274 = vsel %vm272, %v203, 0
        %v277 = vsel %vm272, %v204, 0
        %279 = vmatprep.subr.bf16.mxu0 0
        %280 = vmatpush1.bf16.msra.mxu0 0
        %281 = vmatprep.subr.bf16.mxu0 0
        %282 = vmatpush1.bf16.msra.mxu0 0
        %283 = vmatprep.subr.bf16.mxu0 0
        %284 = vmatpush1.bf16.msra.mxu0 0
        %285 = vmatprep.subr.bf16.mxu0 0
        %286 = vmatpush1.bf16.msra.mxu0 0
        %287 = vmatprep.subr.bf16.mxu0 0
        %288 = vmatpush1.bf16.msra.mxu0 0
        %289 = vmatprep.subr.bf16.mxu0 0
        %290 = vmatpush1.bf16.msra.mxu0 0
        %291 = vmatprep.subr.bf16.mxu0 0
        %292 = vmatpush1.bf16.msra.mxu0 0
        %293 = vmatprep.subr.bf16.mxu0 %v277
        %294 = vmatpush1.bf16.msra.mxu0 %v274
        %295 = vmatprep.subr.bf16.mxu0 0
        %296 = vmatpush2.bf16.msra.mxu0 0
        %297 = vmatprep.subr.bf16.mxu0 0
        %298 = vmatpush2.bf16.msra.mxu0 0
        %299 = vmatprep.subr.bf16.mxu0 0
        %300 = vmatpush2.bf16.msra.mxu0 0
        %301 = vmatprep.subr.bf16.mxu0 0
        %302 = vmatpush2.bf16.msra.mxu0 0
        %303 = vmatprep.subr.bf16.mxu0 0
        %304 = vmatpush2.bf16.msra.mxu0 0
        %305 = vmatprep.subr.bf16.mxu0 0
        %306 = vmatpush2.bf16.msra.mxu0 0
        %307 = vmatprep.subr.bf16.mxu0 0
        %308 = vmatpush2.bf16.msra.mxu0 0
        %309 = vmatprep.subr.bf16.mxu0 0
        %310 = vmatpush2.bf16.msra.mxu0 0
        %311 = vmatprep.mubr.bf16.mxu0 0
        %312 = vmatmul.mubr.bf16.gmra.mxu0 %v264
        %v313 = vpop.f32.mrf.mxu0
        %v314 = vadd.f32 %v220, %v313
        %v315 = vpop.f32.mrf.mxu0
        %v316 = vadd.f32 %v220, %v315
        %v317 = vpop.f32.mrf.mxu0
        %v318 = vadd.f32 %v225, %v317
        %v319 = vpop.f32.mrf.mxu0
        %v320 = vadd.f32 %v225, %v319
        %321 = vmatprep.mubr.bf16.mxu0 0
        %322 = vmatmul.mubr.bf16.gmra.mxu0 %v267
        %v323 = vpop.f32.mrf.mxu0
        %v324 = vadd.f32 %v230, %v323
        %v325 = vpop.f32.mrf.mxu0
        %v326 = vadd.f32 %v230, %v325
        %v327 = vpop.f32.mrf.mxu0
        %v328 = vadd.f32 %v235, %v327
        %v329 = vpop.f32.mrf.mxu0
        %v330 = vadd.f32 %v235, %v329
        %331 = vmatprep.mubr.bf16.mxu0 0
        %332 = vmatmul.mubr.bf16.gmra.mxu0 %v270
        %v333 = vpop.f32.mrf.mxu0
        %v334 = vadd.f32 %v240, %v333
        %v335 = vpop.f32.mrf.mxu0
        %v336 = vadd.f32 %v240, %v335
        %v337 = vpop.f32.mrf.mxu0
        %v338 = vadd.f32 %v245, %v337
        %v339 = vpop.f32.mrf.mxu0
        %v340 = vadd.f32 %v245, %v339
        %341 = vdwg.mxu0
        %v342 = vpack.c.bf16 %v318, %v314
        %v343 = vpack.c.bf16 %v320, %v316
        %v344 = vpack.c.bf16 %v328, %v324
        %v345 = vpack.c.bf16 %v330, %v326
        %v346 = vpack.c.bf16 %v338, %v334
        %v347 = vpack.c.bf16 %v340, %v336
        %v354 = vunpack.c.l.b16 %v342
        %v355 = vunpack.c.l.b16 %v343
        %v356 = vunpack.c.h.b16 %v342
        %v357 = vunpack.c.h.b16 %v343
        %v358 = vunpack.c.l.b16 %v344
        %v359 = vunpack.c.l.b16 %v345
        %v360 = vunpack.c.h.b16 %v344
        %v361 = vunpack.c.h.b16 %v345
        %v362 = vunpack.c.l.b16 %v346
        %v363 = vunpack.c.l.b16 %v347
        %v364 = vunpack.c.h.b16 %v346
        %v365 = vunpack.c.h.b16 %v347
        %v366 = vpack.c.b16 %v355, %v354
        %v367 = vpack.c.b16 %v357, %v356
        %v368 = vpack.c.b16 %v359, %v358
        %v369 = vpack.c.b16 %v361, %v360
        %v370 = vpack.c.b16 %v363, %v362
        %v371 = vpack.c.b16 %v365, %v364
        %378 = vst [vmem:[%s188] sm:$0xff] %v366
        %379 = vst [vmem:[%s188 + $0x8] sm:$0xff] %v367
        %380 = vst [vmem:[%s188 + $0x10] sm:$0xff] %v368
        %381 = vst [vmem:[%s188 + $0x18] sm:$0xff] %v369
        %382 = vst [vmem:[%s188 + $0x20] sm:$0xff] %v370
        %383 = vst [vmem:[%s188 + $0x28] sm:$0xff] %v371
        %s384 = sand.u32 %s109, 1
        %s385 = scalar_lea.sflag [#allocation3], %s384
        %s386 = sand.u32 %s109, 1
        %s387 = smul.addr %s386, 48
        %s388 = scalar_lea.vmem [#allocation2], %s387
        // Predicated region
        $region33: #{tpu_custom_call.1} parent=31 // pred_check
          %p389 = pneg %p119
        $region34: #{tpu_custom_call.1} parent=31 // pred_check_branch
          %391 = sbr.rel (%p389) target = $region36
        $region35: #{tpu_custom_call.1} parent=31 // pred_region
          %s392 = smul.u32 2, %s22
          %s394 = ssub.s32 768, 768
          %395 = vsyncadd %s385, %s394
          %s396 = smul.addr %s21, 12
          %s397 = sadd.s32 %s392, %s396
          %s398 = smul.addr %s397, 64
          %s399 = scalar_lea.hbm %s3, %s398
          %s400 = sshll.u32 %s388, 4
          %s401 = int_to_ptr.vmem [resolvable:$true] %s400
          %406 = dma.vmem_to_hbm [thread:$0]  %s401, 768, %s399, %s385, 128, 128, 8
        $region36: #{tpu_custom_call.1} parent=31 // pred_fallthru
          _
      $region32: #{tpu_custom_call.1} parent=5 // pred_fallthru
        _
      %p407 = scmp.le.s32.totalorder 2, %s12
      // Predicated region
      $region37: #{tpu_custom_call.1} parent=5 // pred_check
        %p408 = pneg %p407
      $region38: #{tpu_custom_call.1} parent=5 // pred_check_branch
        %410 = sbr.rel (%p408) target = $region40
      $region39: #{tpu_custom_call.1} parent=5 // pred_region
        %s411 = ssub.s32 %s12, 2
        // Predicated region
        $region41: #{tpu_custom_call.1} parent=39 // pred_check
          %p412 = pneg %p125
        $region42: #{tpu_custom_call.1} parent=39 // pred_check_branch
          %414 = sbr.rel (%p412) target = $region44
        $region43: #{tpu_custom_call.1} parent=39 // pred_region
          %s415 = sand.u32 %s110, 1
          %s416 = scalar_lea.sflag [#allocation3], %s415
          %s417 = sand.u32 %s110, 1
          %s418 = smul.addr %s417, 48
          %s419 = scalar_lea.vmem [#allocation2], %s418
          %420 = dma.done %s416, 768
        $region44: #{tpu_custom_call.1} parent=39 // pred_fallthru
          _
      $region40: #{tpu_custom_call.1} parent=5 // pred_fallthru
        _
    $region6: #{tpu_custom_call.1} parent=1 // loop_footer
      %s16 = sadd.s32 1, %s12
    $region7: #{tpu_custom_call.1} parent=1 // loop_footer_branch
      %11 = sbr.rel target = $region3
    $region8: #{tpu_custom_call.1} parent=1 // loop_exit
      _
    %421 = vsyncpa [#allocation3], 1
    %s422 = scalar_lea.sflag [#allocation3], 1
    %423 = vsyncpa %s422, 1

</llo_original>
